<compile_context>
chip_gen: v7x
topology: tpu7x:2x2x1
jax: 0.10.0
libtpu: 0.0.40
codegen_flags: <defaults>
</compile_context>

<pallas_src>
import jax
import jax.numpy as jnp
from jax.experimental import pallas as pl
from jax.experimental.pallas import tpu as pltpu

LANE = 128   # pad feature (lane) dims of the small parameter tensors to this


def _round_up(n, m):
    return ((n + m - 1) // m) * m


def _make_kernel(B, T, H_pad):
    """Fused kernel: batched input projection + unrolled recurrence + fc head."""

    def kernel(x_ref, wih_ref, whh_ref, brnn_ref, wfc_ref, bfc_ref, out_ref):
        # ---- Phase 1: input projection for ALL timesteps, off the serial
        # critical path (one MXU matmul with a tall LHS instead of T pushes).
        x_bf = x_ref[...].astype(jnp.bfloat16)                    # (B*T, D_in)
        u = jnp.dot(x_bf, wih_ref[...],
                    preferred_element_type=jnp.float32)            # (B*T, H_pad)
        u = u.reshape(B, T, H_pad)                                  # tile-aligned split

        # ---- Hoisted loop-invariants (broadcast_in_dim is not CSE'd by JAX).
        bias = jnp.broadcast_to(brnn_ref[...], (B, H_pad))          # f32
        w_hh = whh_ref[...]                                         # bf16

        # ---- Phase 2: recurrence.  T is small & static -> fully unrolled at
        # trace time (equivalent to lax.fori_loop(..., unroll=True)).  h is
        # carried in bf16 (matmul input dtype); accumulation stays f32.
        h = jnp.zeros((B, H_pad), jnp.bfloat16)
        for t in range(T):
            acc = (u[:, t, :]
                   + jnp.dot(h, w_hh, preferred_element_type=jnp.float32)
                   + bias)
            h = jnp.tanh(acc).astype(jnp.bfloat16)

        # ---- fc head: single lane-dense output store.
        y = jnp.dot(h, wfc_ref[...], preferred_element_type=jnp.float32)
        out_ref[...] = (y + bfc_ref[...]).astype(out_ref.dtype)

    return kernel


@jax.jit
def rnn_to_single_out_forward(x, params):
    """x: [B, T, D_in] float32.  Returns [B, OUT] float32."""
    B, T, D_in = x.shape
    w_ih, w_hh, b_rnn = params["w_ih"], params["w_hh"], params["b_rnn"]
    w_fc, b_fc = params["w_fc"], params["b_fc"]
    HID = w_hh.shape[0]
    OUT = w_fc.shape[1]

    H_pad = _round_up(HID, LANE)
    O_pad = _round_up(OUT, LANE)

    # x: free reshape only -- no pad / transpose / dtype round-trip through HBM.
    x2d = x.reshape(B * T, D_in)

    # Small parameter tensors: pad lane dims to 128 once, cast matmul weights
    # to bf16.  Zero padding + tanh(0) = 0 keeps padded lanes exactly zero.
    wih_p = (jnp.zeros((D_in, H_pad), jnp.float32)
             .at[:, :HID].set(w_ih).astype(jnp.bfloat16))
    whh_p = (jnp.zeros((H_pad, H_pad), jnp.float32)
             .at[:HID, :HID].set(w_hh).astype(jnp.bfloat16))
    wfc_p = (jnp.zeros((H_pad, O_pad), jnp.float32)
             .at[:HID, :OUT].set(w_fc).astype(jnp.bfloat16))
    brnn_p = jnp.zeros((1, H_pad), jnp.float32).at[0, :HID].set(b_rnn)
    bfc_p = jnp.zeros((1, O_pad), jnp.float32).at[0, :OUT].set(b_fc)

    # Cost hint for XLA scheduling of the single fused call.
    flops = (2 * B * T * D_in * H_pad          # batched input projection
             + T * 2 * B * H_pad * H_pad       # recurrence
             + 2 * B * H_pad * O_pad)          # fc head
    bytes_accessed = (x2d.size * 4
                      + (wih_p.size + whh_p.size + wfc_p.size) * 2
                      + (brnn_p.size + bfc_p.size + B * O_pad) * 4)
    cost = pl.CostEstimate(flops=flops,
                           transcendentals=T * B * H_pad,
                           bytes_accessed=bytes_accessed)

    vmem = pl.BlockSpec(memory_space=pltpu.MemorySpace.VMEM)

    out_pad = pl.pallas_call(
        _make_kernel(B, T, H_pad),
        out_shape=jax.ShapeDtypeStruct((B, O_pad), jnp.float32),
        in_specs=[vmem] * 6,
        out_specs=vmem,
        cost_estimate=cost,
    )(x2d, wih_p, whh_p, brnn_p, wfc_p, bfc_p)

    # TODO(synk): for long sequences / large batches, add a time-chunk
    # ("arbitrary") grid axis over VMEM-resident x blocks and, on v7x, a
    # leading batch-tile axis marked "parallel" to use both TensorCores.
    return out_pad[:, :OUT]


def init_params(key, d_in, hidden, out_dim):
    ks = jax.random.split(key, 6)

    def unif(k, shape, fan_in):
        bound = 1.0 / jnp.sqrt(jnp.float32(fan_in))
        return jax.random.uniform(k, shape, jnp.float32, -bound, bound)

    return {
        "w_ih": unif(ks[0], (d_in, hidden), hidden),
        "w_hh": unif(ks[1], (hidden, hidden), hidden),
        "b_rnn": unif(ks[2], (hidden,), hidden),
        "w_fc": unif(ks[3], (hidden, out_dim), hidden),
        "b_fc": unif(ks[4], (out_dim,), hidden),
    }


def reference_forward(x, p):
    """Pure-JAX reference with the same bf16 weight/activation casting."""
    B, T, D_in = x.shape
    HID = p["w_hh"].shape[0]
    w_ih = p["w_ih"].astype(jnp.bfloat16)
    w_hh = p["w_hh"].astype(jnp.bfloat16)
    w_fc = p["w_fc"].astype(jnp.bfloat16)
    h = jnp.zeros((B, HID), jnp.float32)
    for t in range(T):
        x_t = x[:, t, :].astype(jnp.bfloat16)
        a = (jnp.dot(x_t, w_ih, preferred_element_type=jnp.float32)
             + jnp.dot(h.astype(jnp.bfloat16), w_hh,
                       preferred_element_type=jnp.float32)
             + p["b_rnn"][None, :])
        h = jnp.tanh(a)
    return (jnp.dot(h.astype(jnp.bfloat16), w_fc,
                    preferred_element_type=jnp.float32)
            + p["b_fc"][None, :])


if __name__ == "__main__":
    B, T, D_IN = 2, 8, 32
    HID, OUT = 32, 1

    key = jax.random.PRNGKey(0)
    kx, kparams = jax.random.split(key)
    x = jax.random.normal(kx, (B, T, D_IN), jnp.float32)
    params = init_params(kparams, D_IN, HID, OUT)

    out = rnn_to_single_out_forward(x, params)
    jax.block_until_ready(out)

    ref = reference_forward(x, params)
    assert out.shape == (B, OUT)
    assert jnp.allclose(out, ref, atol=2e-3, rtol=2e-3), (
        f"max err {jnp.max(jnp.abs(out - ref))}")

    print("KERNEL_OK")
</pallas_src>

<mosaic_0001>
module attributes {stable_mosaic.version = 11 : i64} {
  func.func @kernel(%arg0: memref<16x32xf32, #tpu.memory_space<vmem>>, %arg1: memref<32x128xbf16, #tpu.memory_space<vmem>>, %arg2: memref<128x128xbf16, #tpu.memory_space<vmem>>, %arg3: memref<1x128xf32, #tpu.memory_space<vmem>>, %arg4: memref<128x128xbf16, #tpu.memory_space<vmem>>, %arg5: memref<1x128xf32, #tpu.memory_space<vmem>>, %arg6: memref<2x128xf32, #tpu.memory_space<vmem>>) attributes {dimension_semantics = [], scalar_prefetch = 0 : i64, scratch_operands = 0 : i64, tpu.core_type = #tpu.core_type<tc>} {
    %c0 = arith.constant 0 : index
    %c0_0 = arith.constant 0 : index
    %0 = vector.load %arg0[%c0, %c0_0] : memref<16x32xf32, #tpu.memory_space<vmem>>, vector<16x32xf32>
    %1 = arith.truncf %0 : vector<16x32xf32> to vector<16x32xbf16>
    %c0_1 = arith.constant 0 : index
    %c0_2 = arith.constant 0 : index
    %2 = vector.load %arg1[%c0_1, %c0_2] : memref<32x128xbf16, #tpu.memory_space<vmem>>, vector<32x128xbf16>
    %cst = arith.constant dense<0.000000e+00> : vector<16x128xf32>
    %3 = tpu.matmul %1, %2, %cst {dimension_numbers = #tpu.dot_dimension_numbers<[1], [0], [0], [1], [0, 0, 1, 1], [], []>} : vector<16x32xbf16>, vector<32x128xbf16>, vector<16x128xf32> -> vector<16x128xf32>
    %4 = vector.shape_cast %3 : vector<16x128xf32> to vector<2x8x128xf32>
    %c0_3 = arith.constant 0 : index
    %c0_4 = arith.constant 0 : index
    %5 = vector.load %arg3[%c0_3, %c0_4] : memref<1x128xf32, #tpu.memory_space<vmem>>, vector<1x128xf32>
    %6 = vector.shape_cast %5 : vector<1x128xf32> to vector<1x128xf32>
    %7 = vector.broadcast %6 : vector<1x128xf32> to vector<2x128xf32>
    %c0_5 = arith.constant 0 : index
    %c0_6 = arith.constant 0 : index
    %8 = vector.load %arg2[%c0_5, %c0_6] : memref<128x128xbf16, #tpu.memory_space<vmem>>, vector<128x128xbf16>
    %cst_7 = arith.constant 0.000000e+00 : bf16
    %9 = vector.broadcast %cst_7 : bf16 to vector<2x128xbf16>
    %10 = vector.extract_strided_slice %4 {offsets = [0, 0, 0], sizes = [2, 1, 128], strides = [1, 1, 1]} : vector<2x8x128xf32> to vector<2x1x128xf32>
    %11 = vector.shape_cast %10 : vector<2x1x128xf32> to vector<2x128xf32>
    %cst_8 = arith.constant dense<0.000000e+00> : vector<2x128xf32>
    %12 = tpu.matmul %9, %8, %cst_8 {dimension_numbers = #tpu.dot_dimension_numbers<[1], [0], [0], [1], [0, 0, 1, 1], [], []>} : vector<2x128xbf16>, vector<128x128xbf16>, vector<2x128xf32> -> vector<2x128xf32>
    %13 = arith.addf %11, %12 : vector<2x128xf32>
    %14 = arith.addf %13, %7 : vector<2x128xf32>
    %15 = math.tanh %14 : vector<2x128xf32>
    %16 = arith.truncf %15 : vector<2x128xf32> to vector<2x128xbf16>
    %17 = vector.extract_strided_slice %4 {offsets = [0, 1, 0], sizes = [2, 1, 128], strides = [1, 1, 1]} : vector<2x8x128xf32> to vector<2x1x128xf32>
    %18 = vector.shape_cast %17 : vector<2x1x128xf32> to vector<2x128xf32>
    %cst_9 = arith.constant dense<0.000000e+00> : vector<2x128xf32>
    %19 = tpu.matmul %16, %8, %cst_9 {dimension_numbers = #tpu.dot_dimension_numbers<[1], [0], [0], [1], [0, 0, 1, 1], [], []>} : vector<2x128xbf16>, vector<128x128xbf16>, vector<2x128xf32> -> vector<2x128xf32>
    %20 = arith.addf %18, %19 : vector<2x128xf32>
    %21 = arith.addf %20, %7 : vector<2x128xf32>
    %22 = math.tanh %21 : vector<2x128xf32>
    %23 = arith.truncf %22 : vector<2x128xf32> to vector<2x128xbf16>
    %24 = vector.extract_strided_slice %4 {offsets = [0, 2, 0], sizes = [2, 1, 128], strides = [1, 1, 1]} : vector<2x8x128xf32> to vector<2x1x128xf32>
    %25 = vector.shape_cast %24 : vector<2x1x128xf32> to vector<2x128xf32>
    %cst_10 = arith.constant dense<0.000000e+00> : vector<2x128xf32>
    %26 = tpu.matmul %23, %8, %cst_10 {dimension_numbers = #tpu.dot_dimension_numbers<[1], [0], [0], [1], [0, 0, 1, 1], [], []>} : vector<2x128xbf16>, vector<128x128xbf16>, vector<2x128xf32> -> vector<2x128xf32>
    %27 = arith.addf %25, %26 : vector<2x128xf32>
    %28 = arith.addf %27, %7 : vector<2x128xf32>
    %29 = math.tanh %28 : vector<2x128xf32>
    %30 = arith.truncf %29 : vector<2x128xf32> to vector<2x128xbf16>
    %31 = vector.extract_strided_slice %4 {offsets = [0, 3, 0], sizes = [2, 1, 128], strides = [1, 1, 1]} : vector<2x8x128xf32> to vector<2x1x128xf32>
    %32 = vector.shape_cast %31 : vector<2x1x128xf32> to vector<2x128xf32>
    %cst_11 = arith.constant dense<0.000000e+00> : vector<2x128xf32>
    %33 = tpu.matmul %30, %8, %cst_11 {dimension_numbers = #tpu.dot_dimension_numbers<[1], [0], [0], [1], [0, 0, 1, 1], [], []>} : vector<2x128xbf16>, vector<128x128xbf16>, vector<2x128xf32> -> vector<2x128xf32>
    %34 = arith.addf %32, %33 : vector<2x128xf32>
    %35 = arith.addf %34, %7 : vector<2x128xf32>
    %36 = math.tanh %35 : vector<2x128xf32>
    %37 = arith.truncf %36 : vector<2x128xf32> to vector<2x128xbf16>
    %38 = vector.extract_strided_slice %4 {offsets = [0, 4, 0], sizes = [2, 1, 128], strides = [1, 1, 1]} : vector<2x8x128xf32> to vector<2x1x128xf32>
    %39 = vector.shape_cast %38 : vector<2x1x128xf32> to vector<2x128xf32>
    %cst_12 = arith.constant dense<0.000000e+00> : vector<2x128xf32>
    %40 = tpu.matmul %37, %8, %cst_12 {dimension_numbers = #tpu.dot_dimension_numbers<[1], [0], [0], [1], [0, 0, 1, 1], [], []>} : vector<2x128xbf16>, vector<128x128xbf16>, vector<2x128xf32> -> vector<2x128xf32>
    %41 = arith.addf %39, %40 : vector<2x128xf32>
    %42 = arith.addf %41, %7 : vector<2x128xf32>
    %43 = math.tanh %42 : vector<2x128xf32>
    %44 = arith.truncf %43 : vector<2x128xf32> to vector<2x128xbf16>
    %45 = vector.extract_strided_slice %4 {offsets = [0, 5, 0], sizes = [2, 1, 128], strides = [1, 1, 1]} : vector<2x8x128xf32> to vector<2x1x128xf32>
    %46 = vector.shape_cast %45 : vector<2x1x128xf32> to vector<2x128xf32>
    %cst_13 = arith.constant dense<0.000000e+00> : vector<2x128xf32>
    %47 = tpu.matmul %44, %8, %cst_13 {dimension_numbers = #tpu.dot_dimension_numbers<[1], [0], [0], [1], [0, 0, 1, 1], [], []>} : vector<2x128xbf16>, vector<128x128xbf16>, vector<2x128xf32> -> vector<2x128xf32>
    %48 = arith.addf %46, %47 : vector<2x128xf32>
    %49 = arith.addf %48, %7 : vector<2x128xf32>
    %50 = math.tanh %49 : vector<2x128xf32>
    %51 = arith.truncf %50 : vector<2x128xf32> to vector<2x128xbf16>
    %52 = vector.extract_strided_slice %4 {offsets = [0, 6, 0], sizes = [2, 1, 128], strides = [1, 1, 1]} : vector<2x8x128xf32> to vector<2x1x128xf32>
    %53 = vector.shape_cast %52 : vector<2x1x128xf32> to vector<2x128xf32>
    %cst_14 = arith.constant dense<0.000000e+00> : vector<2x128xf32>
    %54 = tpu.matmul %51, %8, %cst_14 {dimension_numbers = #tpu.dot_dimension_numbers<[1], [0], [0], [1], [0, 0, 1, 1], [], []>} : vector<2x128xbf16>, vector<128x128xbf16>, vector<2x128xf32> -> vector<2x128xf32>
    %55 = arith.addf %53, %54 : vector<2x128xf32>
    %56 = arith.addf %55, %7 : vector<2x128xf32>
    %57 = math.tanh %56 : vector<2x128xf32>
    %58 = arith.truncf %57 : vector<2x128xf32> to vector<2x128xbf16>
    %59 = vector.extract_strided_slice %4 {offsets = [0, 7, 0], sizes = [2, 1, 128], strides = [1, 1, 1]} : vector<2x8x128xf32> to vector<2x1x128xf32>
    %60 = vector.shape_cast %59 : vector<2x1x128xf32> to vector<2x128xf32>
    %cst_15 = arith.constant dense<0.000000e+00> : vector<2x128xf32>
    %61 = tpu.matmul %58, %8, %cst_15 {dimension_numbers = #tpu.dot_dimension_numbers<[1], [0], [0], [1], [0, 0, 1, 1], [], []>} : vector<2x128xbf16>, vector<128x128xbf16>, vector<2x128xf32> -> vector<2x128xf32>
    %62 = arith.addf %60, %61 : vector<2x128xf32>
    %63 = arith.addf %62, %7 : vector<2x128xf32>
    %64 = math.tanh %63 : vector<2x128xf32>
    %65 = arith.truncf %64 : vector<2x128xf32> to vector<2x128xbf16>
    %c0_16 = arith.constant 0 : index
    %c0_17 = arith.constant 0 : index
    %66 = vector.load %arg4[%c0_16, %c0_17] : memref<128x128xbf16, #tpu.memory_space<vmem>>, vector<128x128xbf16>
    %cst_18 = arith.constant dense<0.000000e+00> : vector<2x128xf32>
    %67 = tpu.matmul %65, %66, %cst_18 {dimension_numbers = #tpu.dot_dimension_numbers<[1], [0], [0], [1], [0, 0, 1, 1], [], []>} : vector<2x128xbf16>, vector<128x128xbf16>, vector<2x128xf32> -> vector<2x128xf32>
    %c0_19 = arith.constant 0 : index
    %c0_20 = arith.constant 0 : index
    %68 = vector.load %arg5[%c0_19, %c0_20] : memref<1x128xf32, #tpu.memory_space<vmem>>, vector<1x128xf32>
    %69 = vector.broadcast %68 : vector<1x128xf32> to vector<2x128xf32>
    %70 = arith.addf %67, %69 : vector<2x128xf32>
    %c0_21 = arith.constant 0 : index
    %c0_22 = arith.constant 0 : index
    %71 = vector.load %arg6[%c0_21, %c0_22] : memref<2x128xf32, #tpu.memory_space<vmem>>, vector<2x128xf32>
    tpu.vector_store %arg6[%c0_21, %c0_22], %70 {strides = array<i32>} : memref<2x128xf32, #tpu.memory_space<vmem>>, vector<2x128xf32>,
    return
  }
}

</mosaic_0001>

<llo_original>
// kernel: rnn_to_single_out_forward.1
$region0: #{rnn_to_single_out_forward.1}
  #allocation0 [shape = 'u32[]', space=smem, size = 0x4, offset = 0x4, fixed_abs, tag = 'smem constant byte address 0x4 - core index']
  #allocation1 [shape = 'u32[144,128]{1,0:T(1,128)}', space=vmem, size = 0x12000, scoped, tag = 'internal scratch']
  %s0 = inlined_call_operand.vmem [shape: f32[16,32], index: 0, kind: input, shape index: {}]
  %s1 = inlined_call_operand.vmem [shape: bf16[32,128], index: 1, kind: input, shape index: {}]
  %s2 = inlined_call_operand.vmem [shape: bf16[128,128], index: 2, kind: input, shape index: {}]
  %s3 = inlined_call_operand.vmem [shape: f32[1,128], index: 3, kind: input, shape index: {}]
  %s4 = inlined_call_operand.vmem [shape: bf16[128,128], index: 4, kind: input, shape index: {}]
  %s5 = inlined_call_operand.vmem [shape: f32[1,128], index: 5, kind: input, shape index: {}]
  %s6 = inlined_call_operand.vmem [shape: f32[2,128], index: 6, kind: output, shape index: {}]
  %s7 = sld [smem:[#allocation0]]
  $region34: #{rnn_to_single_out_forward.1} parent=0
    _
  %s9 = ssub.s32 1, %s7
  %s10 = scalar_select 0, %s9, %s7
  // Predicated region
  $region2: #{rnn_to_single_out_forward.1} parent=0 // pred_check
    _
  $region3: #{rnn_to_single_out_forward.1} parent=0 // pred_check_branch
    %12 = sbr.rel (0) target = $region5
  $region4: #{rnn_to_single_out_forward.1} parent=0 // pred_region
    _
  $region5: #{rnn_to_single_out_forward.1} parent=0 // pred_fallthru
    _
  // Predicated region
  $region6: #{rnn_to_single_out_forward.1} parent=0 // pred_check
    _
  $region7: #{rnn_to_single_out_forward.1} parent=0 // pred_check_branch
    %14 = sbr.rel (0) target = $region9
  $region8: #{rnn_to_single_out_forward.1} parent=0 // pred_region
    _
  $region9: #{rnn_to_single_out_forward.1} parent=0 // pred_fallthru
    _
  // Predicated region
  $region10: #{rnn_to_single_out_forward.1} parent=0 // pred_check
    _
  $region11: #{rnn_to_single_out_forward.1} parent=0 // pred_check_branch
    %16 = sbr.rel (0) target = $region13
  $region12: #{rnn_to_single_out_forward.1} parent=0 // pred_region
    _
  $region13: #{rnn_to_single_out_forward.1} parent=0 // pred_fallthru
    _
  // Predicated region
  $region14: #{rnn_to_single_out_forward.1} parent=0 // pred_check
    _
  $region15: #{rnn_to_single_out_forward.1} parent=0 // pred_check_branch
    %18 = sbr.rel (0) target = $region17
  $region16: #{rnn_to_single_out_forward.1} parent=0 // pred_region
    _
  $region17: #{rnn_to_single_out_forward.1} parent=0 // pred_fallthru
    _
  // Predicated region
  $region18: #{rnn_to_single_out_forward.1} parent=0 // pred_check
    _
  $region19: #{rnn_to_single_out_forward.1} parent=0 // pred_check_branch
    %20 = sbr.rel (0) target = $region21
  $region20: #{rnn_to_single_out_forward.1} parent=0 // pred_region
    _
  $region21: #{rnn_to_single_out_forward.1} parent=0 // pred_fallthru
    _
  // Predicated region
  $region22: #{rnn_to_single_out_forward.1} parent=0 // pred_check
    _
  $region23: #{rnn_to_single_out_forward.1} parent=0 // pred_check_branch
    %22 = sbr.rel (0) target = $region25
  $region24: #{rnn_to_single_out_forward.1} parent=0 // pred_region
    _
  $region25: #{rnn_to_single_out_forward.1} parent=0 // pred_fallthru
    _
  %v24 = vld [vmem:[%s0] sm:$0xff]
  %v25 = vld [vmem:[%s0 + $0x8] sm:$0xff]
  %v26 = vpack.c.bf16 %v25, %v24
  %v27 = vld [vmem:[%s1] sm:$0xf]
  %v28 = vld [vmem:[%s1 + $0x4] sm:$0xf]
  %v29 = vld [vmem:[%s1 + $0x8] sm:$0xf]
  %v30 = vld [vmem:[%s1 + $0xc] sm:$0xf]
  %v35 = vunpack.c.l.b16 %v27
  %v36 = vunpack.c.l.b16 %v28
  %v37 = vunpack.c.l.b16 %v29
  %v38 = vunpack.c.l.b16 %v30
  %v39 = vpack.c.b16 %v36, %v35
  %v40 = vpack.c.b16 %v38, %v37
  %vm43 = vcmask 261120
  %v45 = vsel %vm43, %v26, 0
  %47 = vmatprep.subr.bf16.mxu0 0
  %48 = vmatpush1.bf16.msra.mxu0 %v39
  %49 = vmatprep.subr.bf16.mxu0 0
  %50 = vmatpush1.bf16.msra.mxu0 %v40
  %51 = vmatprep.subr.bf16.mxu0 0
  %52 = vmatpush1.bf16.msra.mxu0 0
  %53 = vmatprep.subr.bf16.mxu0 0
  %54 = vmatpush1.bf16.msra.mxu0 0
  %55 = vmatprep.subr.bf16.mxu0 0
  %56 = vmatpush1.bf16.msra.mxu0 0
  %57 = vmatprep.subr.bf16.mxu0 0
  %58 = vmatpush1.bf16.msra.mxu0 0
  %59 = vmatprep.subr.bf16.mxu0 0
  %60 = vmatpush1.bf16.msra.mxu0 0
  %61 = vmatprep.subr.bf16.mxu0 0
  %62 = vmatpush1.bf16.msra.mxu0 0
  %63 = vmatprep.subr.bf16.mxu0 0
  %64 = vmatpush1.bf16.msra.mxu0 0
  %65 = vmatprep.subr.bf16.mxu0 0
  %66 = vmatpush1.bf16.msra.mxu0 0
  %67 = vmatprep.subr.bf16.mxu0 0
  %68 = vmatpush1.bf16.msra.mxu0 0
  %69 = vmatprep.subr.bf16.mxu0 0
  %70 = vmatpush1.bf16.msra.mxu0 0
  %71 = vmatprep.subr.bf16.mxu0 0
  %72 = vmatpush1.bf16.msra.mxu0 0
  %73 = vmatprep.subr.bf16.mxu0 0
  %74 = vmatpush1.bf16.msra.mxu0 0
  %75 = vmatprep.subr.bf16.mxu0 0
  %76 = vmatpush1.bf16.msra.mxu0 0
  %77 = vmatprep.subr.bf16.mxu0 0
  %78 = vmatpush1.bf16.msra.mxu0 0
  %79 = vmatprep.mubr.bf16.mxu0 0
  %80 = vmatmul.mubr.bf16.gmra.mrb[0].mxu0 %v45
  %v81 = vpop.f32.mrb[0].mxu0
  %v82 = vadd.f32 0.0, %v81
  %v83 = vpop.f32.mrb[0].mxu0
  %v84 = vpop.f32.mrb[0].mxu0
  %v85 = vadd.f32 0.0, %v84
  %v86 = vpop.f32.mrb[0].mxu0
  %87 = vdwg.mxu0
  %v88 = vld [vmem:[%s3] sm:$0x1]
  %v90 = vlaneseq
  %v91 = vshrl.u32 %v90, 7
  %v92 = vsub.s32 0, %v91
  %v93 = vrot.slane %v88, %v92
  %v95 = vld [vmem:[%s2] sm:$0xf]
  %v96 = vld [vmem:[%s2 + $0x4] sm:$0xf]
  %v97 = vld [vmem:[%s2 + $0x8] sm:$0xf]
  %v98 = vld [vmem:[%s2 + $0xc] sm:$0xf]
  %v99 = vld [vmem:[%s2 + $0x10] sm:$0xf]
  %v100 = vld [vmem:[%s2 + $0x14] sm:$0xf]
  %v101 = vld [vmem:[%s2 + $0x18] sm:$0xf]
  %v102 = vld [vmem:[%s2 + $0x1c] sm:$0xf]
  %v103 = vld [vmem:[%s2 + $0x20] sm:$0xf]
  %v104 = vld [vmem:[%s2 + $0x24] sm:$0xf]
  %v105 = vld [vmem:[%s2 + $0x28] sm:$0xf]
  %v106 = vld [vmem:[%s2 + $0x2c] sm:$0xf]
  %v107 = vld [vmem:[%s2 + $0x30] sm:$0xf]
  %v108 = vld [vmem:[%s2 + $0x34] sm:$0xf]
  %v109 = vld [vmem:[%s2 + $0x38] sm:$0xf]
  %v110 = vld [vmem:[%s2 + $0x3c] sm:$0xf]
  %v127 = vunpack.c.l.b16 %v95
  %v128 = vunpack.c.l.b16 %v96
  %v129 = vunpack.c.l.b16 %v97
  %v130 = vunpack.c.l.b16 %v98
  %v131 = vunpack.c.l.b16 %v99
  %v132 = vunpack.c.l.b16 %v100
  %v133 = vunpack.c.l.b16 %v101
  %v134 = vunpack.c.l.b16 %v102
  %v135 = vunpack.c.l.b16 %v103
  %v136 = vunpack.c.l.b16 %v104
  %v137 = vunpack.c.l.b16 %v105
  %v138 = vunpack.c.l.b16 %v106
  %v139 = vunpack.c.l.b16 %v107
  %v140 = vunpack.c.l.b16 %v108
  %v141 = vunpack.c.l.b16 %v109
  %v142 = vunpack.c.l.b16 %v110
  %v143 = vpack.c.b16 %v128, %v127
  %v144 = vpack.c.b16 %v130, %v129
  %v145 = vpack.c.b16 %v132, %v131
  %v146 = vpack.c.b16 %v134, %v133
  %v147 = vpack.c.b16 %v136, %v135
  %v148 = vpack.c.b16 %v138, %v137
  %v149 = vpack.c.b16 %v140, %v139
  %v150 = vpack.c.b16 %v142, %v141
  %159 = vmatprep.subr.bf16.mxu0 0
  %160 = vmatpush1.bf16.msra.mxu0 %v143
  %161 = vmatprep.subr.bf16.mxu0 0
  %162 = vmatpush1.bf16.msra.mxu0 %v144
  %163 = vmatprep.subr.bf16.mxu0 0
  %164 = vmatpush1.bf16.msra.mxu0 %v145
  %165 = vmatprep.subr.bf16.mxu0 0
  %166 = vmatpush1.bf16.msra.mxu0 %v146
  %167 = vmatprep.subr.bf16.mxu0 0
  %168 = vmatpush1.bf16.msra.mxu0 %v147
  %169 = vmatprep.subr.bf16.mxu0 0
  %170 = vmatpush1.bf16.msra.mxu0 %v148
  %171 = vmatprep.subr.bf16.mxu0 0
  %172 = vmatpush1.bf16.msra.mxu0 %v149
  %173 = vmatprep.subr.bf16.mxu0 0
  %174 = vmatpush1.bf16.msra.mxu0 %v150
  %175 = vmatprep.subr.bf16.mxu0 0
  %176 = vmatpush1.bf16.msra.mxu0 0
  %177 = vmatprep.subr.bf16.mxu0 0
  %178 = vmatpush1.bf16.msra.mxu0 0
  %179 = vmatprep.subr.bf16.mxu0 0
  %180 = vmatpush1.bf16.msra.mxu0 0
  %181 = vmatprep.subr.bf16.mxu0 0
  %182 = vmatpush1.bf16.msra.mxu0 0
  %183 = vmatprep.subr.bf16.mxu0 0
  %184 = vmatpush1.bf16.msra.mxu0 0
  %185 = vmatprep.subr.bf16.mxu0 0
  %186 = vmatpush1.bf16.msra.mxu0 0
  %187 = vmatprep.subr.bf16.mxu0 0
  %188 = vmatpush1.bf16.msra.mxu0 0
  %189 = vmatprep.subr.bf16.mxu0 0
  %190 = vmatpush1.bf16.msra.mxu0 0
  %191 = vmatprep.mubr.bf16.mxu0 0
  %192 = vmatmul.mubr.bf16.gmra.mrb[0].mxu0 0
  %v193 = vpop.f32.mrb[0].mxu0
  %v194 = vadd.f32 0.0, %v193
  %v195 = vpop.f32.mrb[0].mxu0
  %v196 = vpop.f32.mrb[0].mxu0
  %v197 = vpop.f32.mrb[0].mxu0
  %198 = vdwg.mxu0
  %v200 = vrot.slane %v194, 1
  %v203 = vadd.f32 %v82, %v194
  %v204 = vadd.f32 %v85, %v200
  %v205 = vadd.f32 %v203, %v93
  %v206 = vadd.f32 %v204, %v93
  %v207 = vtanh.pop %v205
  %v208 = vtanh.pop %v206
  %v209 = vpack.c.bf16 %v207, %v207
  %v210 = vpack.c.bf16 %v208, %v208
  %v213 = vunpack.c.l.b16 %v209
  %v214 = vunpack.c.l.b16 %v210
  %v215 = vrot.slane %v214, 7
  %vm216 = vcmask 1041409
  %v217 = vsel %vm216, %v215, %v213
  %v218 = vpack.c.b16 %v217, %v217
  %220 = vmatprep.subr.bf16.mxu0 0
  %221 = vmatpush1.bf16.msra.mxu0 %v143
  %222 = vmatprep.subr.bf16.mxu0 0
  %223 = vmatpush1.bf16.msra.mxu0 %v144
  %224 = vmatprep.subr.bf16.mxu0 0
  %225 = vmatpush1.bf16.msra.mxu0 %v145
  %226 = vmatprep.subr.bf16.mxu0 0
  %227 = vmatpush1.bf16.msra.mxu0 %v146
  %228 = vmatprep.subr.bf16.mxu0 0
  %229 = vmatpush1.bf16.msra.mxu0 %v147
  %230 = vmatprep.subr.bf16.mxu0 0
  %231 = vmatpush1.bf16.msra.mxu0 %v148
  %232 = vmatprep.subr.bf16.mxu0 0
  %233 = vmatpush1.bf16.msra.mxu0 %v149
  %234 = vmatprep.subr.bf16.mxu0 0
  %235 = vmatpush1.bf16.msra.mxu0 %v150
  %236 = vmatprep.subr.bf16.mxu0 0
  %237 = vmatpush1.bf16.msra.mxu0 0
  %238 = vmatprep.subr.bf16.mxu0 0
  %239 = vmatpush1.bf16.msra.mxu0 0
  %240 = vmatprep.subr.bf16.mxu0 0
  %241 = vmatpush1.bf16.msra.mxu0 0
  %242 = vmatprep.subr.bf16.mxu0 0
  %243 = vmatpush1.bf16.msra.mxu0 0
  %244 = vmatprep.subr.bf16.mxu0 0
  %245 = vmatpush1.bf16.msra.mxu0 0
  %246 = vmatprep.subr.bf16.mxu0 0
  %247 = vmatpush1.bf16.msra.mxu0 0
  %248 = vmatprep.subr.bf16.mxu0 0
  %249 = vmatpush1.bf16.msra.mxu0 0
  %250 = vmatprep.subr.bf16.mxu0 0
  %251 = vmatpush1.bf16.msra.mxu0 0
  %252 = vmatprep.mubr.bf16.mxu0 0
  %253 = vmatmul.mubr.bf16.gmra.mrb[0].mxu0 %v218
  %v254 = vpop.f32.mrb[0].mxu0
  %v255 = vadd.f32 0.0, %v254
  %v256 = vpop.f32.mrb[0].mxu0
  %v257 = vpop.f32.mrb[0].mxu0
  %v258 = vpop.f32.mrb[0].mxu0
  %259 = vdwg.mxu0
  %v261 = vrot.slane %v255, 7
  %v264 = vadd.f32 %v82, %v261
  %v265 = vadd.f32 %v85, %v255
  %v266 = vadd.f32 %v264, %v93
  %v267 = vadd.f32 %v265, %v93
  %v268 = vtanh.pop %v266
  %v269 = vtanh.pop %v267
  %v270 = vpack.c.bf16 %v268, %v268
  %v271 = vpack.c.bf16 %v269, %v269
  %v274 = vunpack.c.l.b16 %v270
  %v275 = vunpack.c.l.b16 %v271
  %v276 = vrot.slane %v274, 1
  %v277 = vsel %vm216, %v275, %v276
  %v278 = vpack.c.b16 %v277, %v277
  %280 = vmatprep.subr.bf16.mxu0 0
  %281 = vmatpush1.bf16.msra.mxu0 %v143
  %282 = vmatprep.subr.bf16.mxu0 0
  %283 = vmatpush1.bf16.msra.mxu0 %v144
  %284 = vmatprep.subr.bf16.mxu0 0
  %285 = vmatpush1.bf16.msra.mxu0 %v145
  %286 = vmatprep.subr.bf16.mxu0 0
  %287 = vmatpush1.bf16.msra.mxu0 %v146
  %288 = vmatprep.subr.bf16.mxu0 0
  %289 = vmatpush1.bf16.msra.mxu0 %v147
  %290 = vmatprep.subr.bf16.mxu0 0
  %291 = vmatpush1.bf16.msra.mxu0 %v148
  %292 = vmatprep.subr.bf16.mxu0 0
  %293 = vmatpush1.bf16.msra.mxu0 %v149
  %294 = vmatprep.subr.bf16.mxu0 0
  %295 = vmatpush1.bf16.msra.mxu0 %v150
  %296 = vmatprep.subr.bf16.mxu0 0
  %297 = vmatpush1.bf16.msra.mxu0 0
  %298 = vmatprep.subr.bf16.mxu0 0
  %299 = vmatpush1.bf16.msra.mxu0 0
  %300 = vmatprep.subr.bf16.mxu0 0
  %301 = vmatpush1.bf16.msra.mxu0 0
  %302 = vmatprep.subr.bf16.mxu0 0
  %303 = vmatpush1.bf16.msra.mxu0 0
  %304 = vmatprep.subr.bf16.mxu0 0
  %305 = vmatpush1.bf16.msra.mxu0 0
  %306 = vmatprep.subr.bf16.mxu0 0
  %307 = vmatpush1.bf16.msra.mxu0 0
  %308 = vmatprep.subr.bf16.mxu0 0
  %309 = vmatpush1.bf16.msra.mxu0 0
  %310 = vmatprep.subr.bf16.mxu0 0
  %311 = vmatpush1.bf16.msra.mxu0 0
  %312 = vmatprep.mubr.bf16.mxu0 0
  %313 = vmatmul.mubr.bf16.gmra.mrb[0].mxu0 %v278
  %v314 = vpop.f32.mrb[0].mxu0
  %v315 = vadd.f32 0.0, %v314
  %v316 = vpop.f32.mrb[0].mxu0
  %v317 = vpop.f32.mrb[0].mxu0
  %v318 = vpop.f32.mrb[0].mxu0
  %319 = vdwg.mxu0
  %v321 = vrot.slane %v315, 6
  %v322 = vrot.slane %v315, 7
  %v325 = vadd.f32 %v82, %v321
  %v326 = vadd.f32 %v85, %v322
  %v327 = vadd.f32 %v325, %v93
  %v328 = vadd.f32 %v326, %v93
  %v329 = vtanh.pop %v327
  %v330 = vtanh.pop %v328
  %v331 = vpack.c.bf16 %v329, %v329
  %v332 = vpack.c.bf16 %v330, %v330
  %v335 = vunpack.c.l.b16 %v331
  %v336 = vunpack.c.l.b16 %v332
  %v337 = vrot.slane %v335, 2
  %v338 = vrot.slane %v336, 1
  %v339 = vsel %vm216, %v338, %v337
  %v340 = vpack.c.b16 %v339, %v339
  %342 = vmatprep.subr.bf16.mxu0 0
  %343 = vmatpush1.bf16.msra.mxu0 %v143
  %344 = vmatprep.subr.bf16.mxu0 0
  %345 = vmatpush1.bf16.msra.mxu0 %v144
  %346 = vmatprep.subr.bf16.mxu0 0
  %347 = vmatpush1.bf16.msra.mxu0 %v145
  %348 = vmatprep.subr.bf16.mxu0 0
  %349 = vmatpush1.bf16.msra.mxu0 %v146
  %350 = vmatprep.subr.bf16.mxu0 0
  %351 = vmatpush1.bf16.msra.mxu0 %v147
  %352 = vmatprep.subr.bf16.mxu0 0
  %353 = vmatpush1.bf16.msra.mxu0 %v148
  %354 = vmatprep.subr.bf16.mxu0 0
  %355 = vmatpush1.bf16.msra.mxu0 %v149
  %356 = vmatprep.subr.bf16.mxu0 0
  %357 = vmatpush1.bf16.msra.mxu0 %v150
  %358 = vmatprep.subr.bf16.mxu0 0
  %359 = vmatpush1.bf16.msra.mxu0 0
  %360 = vmatprep.subr.bf16.mxu0 0
  %361 = vmatpush1.bf16.msra.mxu0 0
  %362 = vmatprep.subr.bf16.mxu0 0
  %363 = vmatpush1.bf16.msra.mxu0 0
  %364 = vmatprep.subr.bf16.mxu0 0
  %365 = vmatpush1.bf16.msra.mxu0 0
  %366 = vmatprep.subr.bf16.mxu0 0
  %367 = vmatpush1.bf16.msra.mxu0 0
  %368 = vmatprep.subr.bf16.mxu0 0
  %369 = vmatpush1.bf16.msra.mxu0 0
  %370 = vmatprep.subr.bf16.mxu0 0
  %371 = vmatpush1.bf16.msra.mxu0 0
  %372 = vmatprep.subr.bf16.mxu0 0
  %373 = vmatpush1.bf16.msra.mxu0 0
  %374 = vmatprep.mubr.bf16.mxu0 0
  %375 = vmatmul.mubr.bf16.gmra.mrb[0].mxu0 %v340
  %v376 = vpop.f32.mrb[0].mxu0
  %v377 = vadd.f32 0.0, %v376
  %v378 = vpop.f32.mrb[0].mxu0
  %v379 = vpop.f32.mrb[0].mxu0
  %v380 = vpop.f32.mrb[0].mxu0
  %381 = vdwg.mxu0
  %v383 = vrot.slane %v377, 5
  %v384 = vrot.slane %v377, 6
  %v387 = vadd.f32 %v82, %v383
  %v388 = vadd.f32 %v85, %v384
  %v389 = vadd.f32 %v387, %v93
  %v390 = vadd.f32 %v388, %v93
  %v391 = vtanh.pop %v389
  %v392 = vtanh.pop %v390
  %v393 = vpack.c.bf16 %v391, %v391
  %v394 = vpack.c.bf16 %v392, %v392
  %v397 = vunpack.c.l.b16 %v393
  %v398 = vunpack.c.l.b16 %v394
  %v399 = vrot.slane %v397, 3
  %v400 = vrot.slane %v398, 2
  %v401 = vsel %vm216, %v400, %v399
  %v402 = vpack.c.b16 %v401, %v401
  %404 = vmatprep.subr.bf16.mxu0 0
  %405 = vmatpush1.bf16.msra.mxu0 %v143
  %406 = vmatprep.subr.bf16.mxu0 0
  %407 = vmatpush1.bf16.msra.mxu0 %v144
  %408 = vmatprep.subr.bf16.mxu0 0
  %409 = vmatpush1.bf16.msra.mxu0 %v145
  %410 = vmatprep.subr.bf16.mxu0 0
  %411 = vmatpush1.bf16.msra.mxu0 %v146
  %412 = vmatprep.subr.bf16.mxu0 0
  %413 = vmatpush1.bf16.msra.mxu0 %v147
  %414 = vmatprep.subr.bf16.mxu0 0
  %415 = vmatpush1.bf16.msra.mxu0 %v148
  %416 = vmatprep.subr.bf16.mxu0 0
  %417 = vmatpush1.bf16.msra.mxu0 %v149
  %418 = vmatprep.subr.bf16.mxu0 0
  %419 = vmatpush1.bf16.msra.mxu0 %v150
  %420 = vmatprep.subr.bf16.mxu0 0
  %421 = vmatpush1.bf16.msra.mxu0 0
  %422 = vmatprep.subr.bf16.mxu0 0
  %423 = vmatpush1.bf16.msra.mxu0 0
  %424 = vmatprep.subr.bf16.mxu0 0
  %425 = vmatpush1.bf16.msra.mxu0 0
  %426 = vmatprep.subr.bf16.mxu0 0
  %427 = vmatpush1.bf16.msra.mxu0 0
  %428 = vmatprep.subr.bf16.mxu0 0
  %429 = vmatpush1.bf16.msra.mxu0 0
  %430 = vmatprep.subr.bf16.mxu0 0
  %431 = vmatpush1.bf16.msra.mxu0 0
  %432 = vmatprep.subr.bf16.mxu0 0
  %433 = vmatpush1.bf16.msra.mxu0 0
  %434 = vmatprep.subr.bf16.mxu0 0
  %435 = vmatpush1.bf16.msra.mxu0 0
  %436 = vmatprep.mubr.bf16.mxu0 0
  %437 = vmatmul.mubr.bf16.gmra.mrb[0].mxu0 %v402
  %v438 = vpop.f32.mrb[0].mxu0
  %v439 = vadd.f32 0.0, %v438
  %v440 = vpop.f32.mrb[0].mxu0
  %v441 = vpop.f32.mrb[0].mxu0
  %v442 = vpop.f32.mrb[0].mxu0
  %443 = vdwg.mxu0
  %v445 = vrot.slane %v439, 4
  %v446 = vrot.slane %v439, 5
  %v449 = vadd.f32 %v82, %v445
  %v450 = vadd.f32 %v85, %v446
  %v451 = vadd.f32 %v449, %v93
  %v452 = vadd.f32 %v450, %v93
  %v453 = vtanh.pop %v451
  %v454 = vtanh.pop %v452
  %v455 = vpack.c.bf16 %v453, %v453
  %v456 = vpack.c.bf16 %v454, %v454
  %v459 = vunpack.c.l.b16 %v455
  %v460 = vunpack.c.l.b16 %v456
  %v461 = vrot.slane %v459, 4
  %v462 = vrot.slane %v460, 3
  %v463 = vsel %vm216, %v462, %v461
  %v464 = vpack.c.b16 %v463, %v463
  %466 = vmatprep.subr.bf16.mxu0 0
  %467 = vmatpush1.bf16.msra.mxu0 %v143
  %468 = vmatprep.subr.bf16.mxu0 0
  %469 = vmatpush1.bf16.msra.mxu0 %v144
  %470 = vmatprep.subr.bf16.mxu0 0
  %471 = vmatpush1.bf16.msra.mxu0 %v145
  %472 = vmatprep.subr.bf16.mxu0 0
  %473 = vmatpush1.bf16.msra.mxu0 %v146
  %474 = vmatprep.subr.bf16.mxu0 0
  %475 = vmatpush1.bf16.msra.mxu0 %v147
  %476 = vmatprep.subr.bf16.mxu0 0
  %477 = vmatpush1.bf16.msra.mxu0 %v148
  %478 = vmatprep.subr.bf16.mxu0 0
  %479 = vmatpush1.bf16.msra.mxu0 %v149
  %480 = vmatprep.subr.bf16.mxu0 0
  %481 = vmatpush1.bf16.msra.mxu0 %v150
  %482 = vmatprep.subr.bf16.mxu0 0
  %483 = vmatpush1.bf16.msra.mxu0 0
  %484 = vmatprep.subr.bf16.mxu0 0
  %485 = vmatpush1.bf16.msra.mxu0 0
  %486 = vmatprep.subr.bf16.mxu0 0
  %487 = vmatpush1.bf16.msra.mxu0 0
  %488 = vmatprep.subr.bf16.mxu0 0
  %489 = vmatpush1.bf16.msra.mxu0 0
  %490 = vmatprep.subr.bf16.mxu0 0
  %491 = vmatpush1.bf16.msra.mxu0 0
  %492 = vmatprep.subr.bf16.mxu0 0
  %493 = vmatpush1.bf16.msra.mxu0 0
  %494 = vmatprep.subr.bf16.mxu0 0
  %495 = vmatpush1.bf16.msra.mxu0 0
  %496 = vmatprep.subr.bf16.mxu0 0
  %497 = vmatpush1.bf16.msra.mxu0 0
  %498 = vmatprep.mubr.bf16.mxu0 0
  %499 = vmatmul.mubr.bf16.gmra.mrb[0].mxu0 %v464
  %v500 = vpop.f32.mrb[0].mxu0
  %v501 = vadd.f32 0.0, %v500
  %v502 = vpop.f32.mrb[0].mxu0
  %v503 = vpop.f32.mrb[0].mxu0
  %v504 = vpop.f32.mrb[0].mxu0
  %505 = vdwg.mxu0
  %v507 = vrot.slane %v501, 3
  %v508 = vrot.slane %v501, 4
  %v511 = vadd.f32 %v82, %v507
  %v512 = vadd.f32 %v85, %v508
  %v513 = vadd.f32 %v511, %v93
  %v514 = vadd.f32 %v512, %v93
  %v515 = vtanh.pop %v513
  %v516 = vtanh.pop %v514
  %v517 = vpack.c.bf16 %v515, %v515
  %v518 = vpack.c.bf16 %v516, %v516
  %v521 = vunpack.c.l.b16 %v517
  %v522 = vunpack.c.l.b16 %v518
  %v523 = vrot.slane %v521, 5
  %v524 = vrot.slane %v522, 4
  %v525 = vsel %vm216, %v524, %v523
  %v526 = vpack.c.b16 %v525, %v525
  %528 = vmatprep.subr.bf16.mxu0 0
  %529 = vmatpush1.bf16.msra.mxu0 %v143
  %530 = vmatprep.subr.bf16.mxu0 0
  %531 = vmatpush1.bf16.msra.mxu0 %v144
  %532 = vmatprep.subr.bf16.mxu0 0
  %533 = vmatpush1.bf16.msra.mxu0 %v145
  %534 = vmatprep.subr.bf16.mxu0 0
  %535 = vmatpush1.bf16.msra.mxu0 %v146
  %536 = vmatprep.subr.bf16.mxu0 0
  %537 = vmatpush1.bf16.msra.mxu0 %v147
  %538 = vmatprep.subr.bf16.mxu0 0
  %539 = vmatpush1.bf16.msra.mxu0 %v148
  %540 = vmatprep.subr.bf16.mxu0 0
  %541 = vmatpush1.bf16.msra.mxu0 %v149
  %542 = vmatprep.subr.bf16.mxu0 0
  %543 = vmatpush1.bf16.msra.mxu0 %v150
  %544 = vmatprep.subr.bf16.mxu0 0
  %545 = vmatpush1.bf16.msra.mxu0 0
  %546 = vmatprep.subr.bf16.mxu0 0
  %547 = vmatpush1.bf16.msra.mxu0 0
  %548 = vmatprep.subr.bf16.mxu0 0
  %549 = vmatpush1.bf16.msra.mxu0 0
  %550 = vmatprep.subr.bf16.mxu0 0
  %551 = vmatpush1.bf16.msra.mxu0 0
  %552 = vmatprep.subr.bf16.mxu0 0
  %553 = vmatpush1.bf16.msra.mxu0 0
  %554 = vmatprep.subr.bf16.mxu0 0
  %555 = vmatpush1.bf16.msra.mxu0 0
  %556 = vmatprep.subr.bf16.mxu0 0
  %557 = vmatpush1.bf16.msra.mxu0 0
  %558 = vmatprep.subr.bf16.mxu0 0
  %559 = vmatpush1.bf16.msra.mxu0 0
  %560 = vmatprep.mubr.bf16.mxu0 0
  %561 = vmatmul.mubr.bf16.gmra.mrb[0].mxu0 %v526
  %v562 = vpop.f32.mrb[0].mxu0
  %v563 = vadd.f32 0.0, %v562
  %v564 = vpop.f32.mrb[0].mxu0
  %v565 = vpop.f32.mrb[0].mxu0
  %v566 = vpop.f32.mrb[0].mxu0
  %567 = vdwg.mxu0
  %v569 = vrot.slane %v563, 2
  %v570 = vrot.slane %v563, 3
  %v573 = vadd.f32 %v82, %v569
  %v574 = vadd.f32 %v85, %v570
  %v575 = vadd.f32 %v573, %v93
  %v576 = vadd.f32 %v574, %v93
  %v577 = vtanh.pop %v575
  %v578 = vtanh.pop %v576
  %v579 = vpack.c.bf16 %v577, %v577
  %v580 = vpack.c.bf16 %v578, %v578
  %v583 = vunpack.c.l.b16 %v579
  %v584 = vunpack.c.l.b16 %v580
  %v585 = vrot.slane %v583, 6
  %v586 = vrot.slane %v584, 5
  %v587 = vsel %vm216, %v586, %v585
  %v588 = vpack.c.b16 %v587, %v587
  %590 = vmatprep.subr.bf16.mxu0 0
  %591 = vmatpush1.bf16.msra.mxu0 %v143
  %592 = vmatprep.subr.bf16.mxu0 0
  %593 = vmatpush1.bf16.msra.mxu0 %v144
  %594 = vmatprep.subr.bf16.mxu0 0
  %595 = vmatpush1.bf16.msra.mxu0 %v145
  %596 = vmatprep.subr.bf16.mxu0 0
  %597 = vmatpush1.bf16.msra.mxu0 %v146
  %598 = vmatprep.subr.bf16.mxu0 0
  %599 = vmatpush1.bf16.msra.mxu0 %v147
  %600 = vmatprep.subr.bf16.mxu0 0
  %601 = vmatpush1.bf16.msra.mxu0 %v148
  %602 = vmatprep.subr.bf16.mxu0 0
  %603 = vmatpush1.bf16.msra.mxu0 %v149
  %604 = vmatprep.subr.bf16.mxu0 0
  %605 = vmatpush1.bf16.msra.mxu0 %v150
  %606 = vmatprep.subr.bf16.mxu0 0
  %607 = vmatpush1.bf16.msra.mxu0 0
  %608 = vmatprep.subr.bf16.mxu0 0
  %609 = vmatpush1.bf16.msra.mxu0 0
  %610 = vmatprep.subr.bf16.mxu0 0
  %611 = vmatpush1.bf16.msra.mxu0 0
  %612 = vmatprep.subr.bf16.mxu0 0
  %613 = vmatpush1.bf16.msra.mxu0 0
  %614 = vmatprep.subr.bf16.mxu0 0
  %615 = vmatpush1.bf16.msra.mxu0 0
  %616 = vmatprep.subr.bf16.mxu0 0
  %617 = vmatpush1.bf16.msra.mxu0 0
  %618 = vmatprep.subr.bf16.mxu0 0
  %619 = vmatpush1.bf16.msra.mxu0 0
  %620 = vmatprep.subr.bf16.mxu0 0
  %621 = vmatpush1.bf16.msra.mxu0 0
  %622 = vmatprep.mubr.bf16.mxu0 0
  %623 = vmatmul.mubr.bf16.gmra.mrb[0].mxu0 %v588
  %v624 = vpop.f32.mrb[0].mxu0
  %v625 = vadd.f32 0.0, %v624
  %v626 = vpop.f32.mrb[0].mxu0
  %v627 = vpop.f32.mrb[0].mxu0
  %v628 = vpop.f32.mrb[0].mxu0
  %629 = vdwg.mxu0
  %v631 = vrot.slane %v625, 1
  %v632 = vrot.slane %v625, 2
  %v635 = vadd.f32 %v82, %v631
  %v636 = vadd.f32 %v85, %v632
  %v637 = vadd.f32 %v635, %v93
  %v638 = vadd.f32 %v636, %v93
  %v639 = vtanh.pop %v637
  %v640 = vtanh.pop %v638
  %v641 = vpack.c.bf16 %v639, %v639
  %v642 = vpack.c.bf16 %v640, %v640
  %v643 = vld [vmem:[%s4] sm:$0xf]
  %v644 = vld [vmem:[%s4 + $0x4] sm:$0xf]
  %v645 = vld [vmem:[%s4 + $0x8] sm:$0xf]
  %v646 = vld [vmem:[%s4 + $0xc] sm:$0xf]
  %v647 = vld [vmem:[%s4 + $0x10] sm:$0xf]
  %v648 = vld [vmem:[%s4 + $0x14] sm:$0xf]
  %v649 = vld [vmem:[%s4 + $0x18] sm:$0xf]
  %v650 = vld [vmem:[%s4 + $0x1c] sm:$0xf]
  %v651 = vld [vmem:[%s4 + $0x20] sm:$0xf]
  %v652 = vld [vmem:[%s4 + $0x24] sm:$0xf]
  %v653 = vld [vmem:[%s4 + $0x28] sm:$0xf]
  %v654 = vld [vmem:[%s4 + $0x2c] sm:$0xf]
  %v655 = vld [vmem:[%s4 + $0x30] sm:$0xf]
  %v656 = vld [vmem:[%s4 + $0x34] sm:$0xf]
  %v657 = vld [vmem:[%s4 + $0x38] sm:$0xf]
  %v658 = vld [vmem:[%s4 + $0x3c] sm:$0xf]
  %v659 = vld [vmem:[%s5] sm:$0x1]
  %v661 = vlaneseq
  %v662 = vshrl.u32 %v661, 7
  %v663 = vsub.s32 0, %v662
  %v664 = vrot.slane %v659, %v663
  %v668 = vunpack.c.l.b16 %v641
  %v669 = vunpack.c.l.b16 %v642
  %v670 = vrot.slane %v668, 7
  %v671 = vrot.slane %v669, 6
  %v672 = vsel %vm216, %v671, %v670
  %v673 = vpack.c.b16 %v672, %v672
  %v691 = vunpack.c.l.b16 %v643
  %v692 = vunpack.c.l.b16 %v644
  %v693 = vunpack.c.l.b16 %v645
  %v694 = vunpack.c.l.b16 %v646
  %v695 = vunpack.c.l.b16 %v647
  %v696 = vunpack.c.l.b16 %v648
  %v697 = vunpack.c.l.b16 %v649
  %v698 = vunpack.c.l.b16 %v650
  %v699 = vunpack.c.l.b16 %v651
  %v700 = vunpack.c.l.b16 %v652
  %v701 = vunpack.c.l.b16 %v653
  %v702 = vunpack.c.l.b16 %v654
  %v703 = vunpack.c.l.b16 %v655
  %v704 = vunpack.c.l.b16 %v656
  %v705 = vunpack.c.l.b16 %v657
  %v706 = vunpack.c.l.b16 %v658
  %v707 = vpack.c.b16 %v692, %v691
  %v708 = vpack.c.b16 %v694, %v693
  %v709 = vpack.c.b16 %v696, %v695
  %v710 = vpack.c.b16 %v698, %v697
  %v711 = vpack.c.b16 %v700, %v699
  %v712 = vpack.c.b16 %v702, %v701
  %v713 = vpack.c.b16 %v704, %v703
  %v714 = vpack.c.b16 %v706, %v705
  %723 = vmatprep.subr.bf16.mxu0 0
  %724 = vmatpush1.bf16.msra.mxu0 %v707
  %725 = vmatprep.subr.bf16.mxu0 0
  %726 = vmatpush1.bf16.msra.mxu0 %v708
  %727 = vmatprep.subr.bf16.mxu0 0
  %728 = vmatpush1.bf16.msra.mxu0 %v709
  %729 = vmatprep.subr.bf16.mxu0 0
  %730 = vmatpush1.bf16.msra.mxu0 %v710
  %731 = vmatprep.subr.bf16.mxu0 0
  %732 = vmatpush1.bf16.msra.mxu0 %v711
  %733 = vmatprep.subr.bf16.mxu0 0
  %734 = vmatpush1.bf16.msra.mxu0 %v712
  %735 = vmatprep.subr.bf16.mxu0 0
  %736 = vmatpush1.bf16.msra.mxu0 %v713
  %737 = vmatprep.subr.bf16.mxu0 0
  %738 = vmatpush1.bf16.msra.mxu0 %v714
  %739 = vmatprep.subr.bf16.mxu0 0
  %740 = vmatpush1.bf16.msra.mxu0 0
  %741 = vmatprep.subr.bf16.mxu0 0
  %742 = vmatpush1.bf16.msra.mxu0 0
  %743 = vmatprep.subr.bf16.mxu0 0
  %744 = vmatpush1.bf16.msra.mxu0 0
  %745 = vmatprep.subr.bf16.mxu0 0
  %746 = vmatpush1.bf16.msra.mxu0 0
  %747 = vmatprep.subr.bf16.mxu0 0
  %748 = vmatpush1.bf16.msra.mxu0 0
  %749 = vmatprep.subr.bf16.mxu0 0
  %750 = vmatpush1.bf16.msra.mxu0 0
  %751 = vmatprep.subr.bf16.mxu0 0
  %752 = vmatpush1.bf16.msra.mxu0 0
  %753 = vmatprep.subr.bf16.mxu0 0
  %754 = vmatpush1.bf16.msra.mxu0 0
  %755 = vmatprep.mubr.bf16.mxu0 0
  %756 = vmatmul.mubr.bf16.gmra.mrb[0].mxu0 %v673
  %v757 = vpop.f32.mrb[0].mxu0
  %v758 = vadd.f32 %v664, %v757
  %v759 = vpop.f32.mrb[0].mxu0
  %v760 = vpop.f32.mrb[0].mxu0
  %v761 = vpop.f32.mrb[0].mxu0
  %762 = vdwg.mxu0
  %763 = vst [vmem:[%s6] sm:$0x3] %v758
  // Predicated region
  $region26: #{rnn_to_single_out_forward.1} parent=0 // pred_check
    _
  $region27: #{rnn_to_single_out_forward.1} parent=0 // pred_check_branch
    %765 = sbr.rel (0) target = $region29
  $region28: #{rnn_to_single_out_forward.1} parent=0 // pred_region
    _
  $region29: #{rnn_to_single_out_forward.1} parent=0 // pred_fallthru
    _
  // Predicated region
  $region30: #{rnn_to_single_out_forward.1} parent=0 // pred_check
    _
  $region31: #{rnn_to_single_out_forward.1} parent=0 // pred_check_branch
    %767 = sbr.rel (0) target = $region33
  $region32: #{rnn_to_single_out_forward.1} parent=0 // pred_region
    _
  $region33: #{rnn_to_single_out_forward.1} parent=0 // pred_fallthru
    _

</llo_original>
